<compile_context>
chip_gen: v7x
topology: tpu7x:2x2x1
jax: 0.10.0
libtpu: 0.0.40
codegen_flags: <defaults>
</compile_context>

<pallas_src>
from typing import NamedTuple, Optional

import jax
import jax.numpy as jnp
from jax.experimental import pallas as pl
from jax.experimental.pallas import tpu as pltpu


class RayBundle(NamedTuple):
    origins: jnp.ndarray                          # (R, 3)
    directions: jnp.ndarray                       # (R, 3)
    sample_points: Optional[jnp.ndarray] = None   # (R, P, 3)
    sample_lengths: Optional[jnp.ndarray] = None  # (R, P, 1)


def _sampler_kernel(const_ref, od_ref, pts_ref):
    # const_ref: (8, 3P)  rows 0..2: sel_c[l] = (l % 3 == c)
    #                     rows 3..5: sel_c[l] * z[l // 3]
    #                     rows 6..7: zero padding (K padded to 8)
    # od_ref:    (TR, 8)  [ox, oy, oz, dx, dy, dz, 0, 0] per ray
    # pts_ref:   (TR, 3P) out[r, 3p+c] = o[r,c] + d[r,c] * z[p]
    pts_ref[...] = jnp.dot(
        od_ref[...], const_ref[...],
        precision=jax.lax.Precision.HIGHEST,
        preferred_element_type=jnp.float32,
    )


def _ceil_to(x: int, m: int) -> int:
    return -(-x // m) * m


def _choose_tile_rays(num_rays: int, n_pts: int,
                      target_block_bytes: int = 8 << 20) -> int:
    """Ray tile: ~target_block_bytes of output per grid step, sublane multiple
    of 8, and an even number of grid steps whenever R >= 16 (v7x: 2 TCs)."""
    bytes_per_ray = 3 * n_pts * 4                      # f32 points per ray
    r_pad8 = _ceil_to(max(num_rays, 1), 8)
    tr = max(8, (target_block_bytes // bytes_per_ray) // 8 * 8)
    tr = min(tr, r_pad8)
    steps = -(-r_pad8 // tr)
    if r_pad8 >= 16:
        steps = max(steps, 2)
        if steps % 2:
            steps += 1
        tr = _ceil_to(-(-r_pad8 // steps), 8)
        tr = max(8, min(tr, r_pad8))
    return int(tr)


class StratifiedRaysampler:
    """JAX/Pallas port of the PyTorch StratifiedRaysampler module."""

    def __init__(self, n_pts_per_ray: int, min_depth: float, max_depth: float):
        self.n_pts_per_ray = n_pts_per_ray
        self.min_depth = min_depth
        self.max_depth = max_depth

    def __call__(self, ray_bundle: RayBundle, *,
                 tile_rays: Optional[int] = None) -> RayBundle:
        origins = ray_bundle.origins.astype(jnp.float32)        # (R, 3)
        directions = ray_bundle.directions.astype(jnp.float32)  # (R, 3)
        R = origins.shape[0]
        P = self.n_pts_per_ray
        L = 3 * P

        # z_vals = linspace(min_depth, max_depth, P), endpoints inclusive.
        z_vals = jnp.linspace(self.min_depth, self.max_depth, P,
                              dtype=jnp.float32)                # (P,)

        if tile_rays is None:
            tile_rays = _choose_tile_rays(R, P)
        tile_rays = max(8, (int(tile_rays) // 8) * 8)

        # Fused MXU LHS: [ox, oy, oz, dx, dy, dz, 0, 0] per ray -> (R, 8).
        od = jnp.concatenate(
            [origins, directions, jnp.zeros((R, 2), jnp.float32)], axis=1)

        # MXU RHS (8, 3P): component selectors, selectors * z, zero pad rows.
        sel = jnp.tile(jnp.eye(3, dtype=jnp.float32), (1, P))   # (3, 3P)
        z_rep = jnp.repeat(z_vals, 3)[None, :]                  # (1, 3P)
        consts = jnp.concatenate(
            [sel, sel * z_rep, jnp.zeros((2, L), jnp.float32)], axis=0)  # (8, 3P)

        grid = (pl.cdiv(R, tile_rays),)   # ragged last block handled by Pallas

        # VMEM budget: double-buffered output block + lane-padded (TR,8)->(TR,128)
        # input block + the small shared constant table.
        out_block_bytes = tile_rays * L * 4
        od_block_bytes = tile_rays * 128 * 4
        const_bytes = 8 * max(L, 128) * 4
        vmem_need = 2 * (out_block_bytes + od_block_bytes + const_bytes)
        vmem_limit = int(min(max(vmem_need + (4 << 20), 16 << 20), 64 << 20))

        pts2d = pl.pallas_call(
            _sampler_kernel,
            out_shape=jax.ShapeDtypeStruct((R, L), jnp.float32),
            grid_spec=pltpu.PrefetchScalarGridSpec(
                num_scalar_prefetch=0,
                grid=grid,
                in_specs=[
                    pl.BlockSpec((8, L), lambda i: (0, 0)),           # constants (shared)
                    pl.BlockSpec((tile_rays, 8), lambda i: (i, 0)),   # fused o|d tile
                ],
                out_specs=pl.BlockSpec((tile_rays, L), lambda i: (i, 0)),
            ),
            compiler_params=pltpu.CompilerParams(
                dimension_semantics=("parallel",),
                vmem_limit_bytes=vmem_limit),
        )(consts, od)

        # Row-major reshape (R, 3P) -> (R, P, 3) is a free metadata op.
        sample_points = pts2d.reshape(R, P, 3)

        # sample_lengths is replicated constant data; keep it out of the
        # store-bound kernel (this broadcast fuses / stays lazy under jit).
        sample_lengths = jnp.broadcast_to(z_vals.reshape(1, P, 1), (R, P, 1))

        return ray_bundle._replace(sample_points=sample_points,
                                   sample_lengths=sample_lengths)


def _reference(origins, directions, n_pts, min_depth, max_depth):
    z = jnp.linspace(min_depth, max_depth, n_pts, dtype=jnp.float32).reshape(-1, 1)
    lengths = jnp.ones((origins.shape[0], n_pts, 1), jnp.float32) * z
    points = origins[:, None, :] + directions[:, None, :] * lengths
    return points, lengths


if __name__ == "__main__":
    key = jax.random.PRNGKey(0)
    k0, k1 = jax.random.split(key)

    num_rays = 128          # e.g. an 8x16 image flattened
    n_pts_per_ray = 64
    min_depth, max_depth = 0.1, 4.0

    origins = jax.random.normal(k0, (num_rays, 3), dtype=jnp.float32)
    dirs = jax.random.normal(k1, (num_rays, 3), dtype=jnp.float32)
    directions = dirs / jnp.linalg.norm(dirs, axis=-1, keepdims=True)

    bundle = RayBundle(origins=origins, directions=directions)

    sampler = StratifiedRaysampler(n_pts_per_ray, min_depth, max_depth)
    out = sampler(bundle)
    jax.block_until_ready(out.sample_points)
    jax.block_until_ready(out.sample_lengths)

    ref_pts, ref_len = _reference(origins, directions,
                                  n_pts_per_ray, min_depth, max_depth)

    assert out.sample_points.shape == (num_rays, n_pts_per_ray, 3)
    assert out.sample_lengths.shape == (num_rays, n_pts_per_ray, 1)
    assert jnp.allclose(out.sample_points, ref_pts, atol=1e-5, rtol=1e-5)
    assert jnp.allclose(out.sample_lengths, ref_len, atol=1e-5, rtol=1e-5)

    print("KERNEL_OK")
</pallas_src>

<mosaic_0001>
module attributes {stable_mosaic.version = 11 : i64} {
  func.func @_sampler_kernel(%arg0: i32, %arg1: memref<8x192xf32, #tpu.memory_space<vmem>>, %arg2: memref<64x8xf32, #tpu.memory_space<vmem>>, %arg3: memref<64x192xf32, #tpu.memory_space<vmem>>) attributes {dimension_semantics = [#tpu.dimension_semantics<parallel>], iteration_bounds = array<i64: 2>, scalar_prefetch = 0 : i64, scratch_operands = 0 : i64, tpu.core_type = #tpu.core_type<tc>, window_params = [{pipeline_mode = #tpu.pipeline_mode<synchronous>, transform_indices = @transform_0, window_bounds = array<i64: 8, 192>}, {transform_indices = @transform_1, window_bounds = array<i64: 64, 8>}, {transform_indices = @transform_2, window_bounds = array<i64: 64, 192>}]} {
    %c0 = arith.constant 0 : index
    %c0_0 = arith.constant 0 : index
    %0 = vector.load %arg2[%c0, %c0_0] : memref<64x8xf32, #tpu.memory_space<vmem>>, vector<64x8xf32>
    %c0_1 = arith.constant 0 : index
    %c0_2 = arith.constant 0 : index
    %1 = vector.load %arg1[%c0_1, %c0_2] : memref<8x192xf32, #tpu.memory_space<vmem>>, vector<8x192xf32>
    %cst = arith.constant dense<0.000000e+00> : vector<64x192xf32>
    %2 = tpu.matmul %0, %1, %cst {dimension_numbers = #tpu.dot_dimension_numbers<[1], [0], [0], [1], [0, 0, 1, 1], [], []>, precision = #tpu.contract_precision<fp32>} : vector<64x8xf32>, vector<8x192xf32>, vector<64x192xf32> -> vector<64x192xf32>
    %c0_3 = arith.constant 0 : index
    %c0_4 = arith.constant 0 : index
    %3 = vector.load %arg3[%c0_3, %c0_4] : memref<64x192xf32, #tpu.memory_space<vmem>>, vector<64x192xf32>
    tpu.vector_store %arg3[%c0_3, %c0_4], %2 {strides = array<i32>} : memref<64x192xf32, #tpu.memory_space<vmem>>, vector<64x192xf32>,
    return
  }
  func.func @transform_0(%arg0: i32) -> (i32, i32) {
    %c0_i32 = arith.constant 0 : i32
    %c0_i32_0 = arith.constant 0 : i32
    %c0_i32_1 = arith.constant 0 : i32
    return %c0_i32, %c0_i32_0 : i32, i32
  }
  func.func @transform_1(%arg0: i32) -> (i32, i32) {
    %c0_i32 = arith.constant 0 : i32
    %c0_i32_0 = arith.constant 0 : i32
    return %arg0, %c0_i32 : i32, i32
  }
  func.func @transform_2(%arg0: i32) -> (i32, i32) {
    %c0_i32 = arith.constant 0 : i32
    %c0_i32_0 = arith.constant 0 : i32
    return %arg0, %c0_i32 : i32, i32
  }
}

</mosaic_0001>

<llo_original>
// kernel: tpu_custom_call.1
$region0: #{tpu_custom_call.1}
  #allocation0 [shape = 'u32[]', space=smem, size = 0x4, offset = 0x4, fixed_abs, tag = 'smem constant byte address 0x4 - core index']
  #allocation1 [shape = 'u32[144,128]{1,0:T(1,128)}', space=vmem, size = 0x12000, scoped, tag = 'internal scratch']
  %s0 = inlined_call_operand.vmem [shape: f32[8,192], index: 0, kind: input, shape index: {}]
  %s1 = inlined_call_operand.vmem [shape: f32[128,8], index: 1, kind: input, shape index: {}]
  %s2 = inlined_call_operand.vmem [shape: f32[128,192], index: 2, kind: output, shape index: {}]
  %s3 = sld [smem:[#allocation0]]
  $region41: #{tpu_custom_call.1} parent=0
    _
  %s5 = ssub.s32 1, %s3
  %s6 = scalar_select 0, %s5, %s3
  loop: start=0, step=1, limit=4
  $region2: #{tpu_custom_call.1} parent=0 // loop_pre_header
    _
  $region3: #{tpu_custom_call.1} parent=0 // loop_header
    %s8 = sphi 0, %s12
    %p9 = scmp.ge.s32.totalorder %s8, 4
    %s16 = sphi 0, %s16
    %s18 = sphi 0, %s16
    %s19 = sphi 0, %s18
    %s33 = sphi 0, %s19
    %s39 = sphi 0, %s41
    %s42 = sphi 0, %s39
    %s43 = sphi 0, %s42
    %s59 = sphi 0, %s43
    %s65 = sphi 0, %s67
    %s68 = sphi 0, %s65
    %s69 = sphi 0, %s68
    %s85 = sphi 0, %s69
  $region4: #{tpu_custom_call.1} parent=0 // loop_header_branch
    %11 = sbr.rel (%p9) target = $region8
  $region5: #{tpu_custom_call.1} parent=0 // loop_body
    %s13 = ssub.s32 %s8, 1
    %s14 = ssub.s32 %s8, 2
    %s15 = sadd.s32 %s8, 1
    %s17 = sadd.s32 %s16, 1
    %p20 = scmp.eq.s32.totalorder %s8, 1
    %p21 = scmp.ne.s32.totalorder %s16, %s18
    %p22 = scmp.eq.s32.totalorder %s8, 0
    %p23 = por %p21, %p22
    %p24 = scmp.ne.s32.totalorder %s16, %s18
    %p25 = scmp.eq.s32.totalorder %s13, 1
    %p26 = por %p24, %p25
    %p27 = scmp.ne.s32.totalorder %s18, %s19
    %p28 = scmp.eq.s32.totalorder %s13, 0
    %p29 = por %p27, %p28
    %p30 = scmp.ne.s32.totalorder %s18, %s19
    %p31 = scmp.eq.s32.totalorder %s14, 1
    %p32 = por %p30, %p31
    %p34 = scmp.ne.s32.totalorder %s19, %s33
    %p35 = scmp.eq.s32.totalorder %s14, 0
    %p36 = por %p34, %p35
    %s37 = ssub.s32 %s8, %s15
    %p38 = scmp.eq.s32.totalorder %s37, 0
    %s40 = sadd.s32 %s39, 1
    %s41 = scalar_select %p38, %s39, %s40
    %p44 = pneg %p38
    %p45 = scmp.eq.s32.totalorder %s8, 1
    %p46 = por %p44, %p45
    %p47 = scmp.ne.s32.totalorder %s39, %s42
    %p48 = scmp.eq.s32.totalorder %s8, 0
    %p49 = por %p47, %p48
    %p50 = scmp.ne.s32.totalorder %s39, %s42
    %p51 = scmp.eq.s32.totalorder %s13, 1
    %p52 = por %p50, %p51
    %p53 = scmp.ne.s32.totalorder %s42, %s43
    %p54 = scmp.eq.s32.totalorder %s13, 0
    %p55 = por %p53, %p54
    %p56 = scmp.ne.s32.totalorder %s42, %s43
    %p57 = scmp.eq.s32.totalorder %s14, 1
    %p58 = por %p56, %p57
    %p60 = scmp.ne.s32.totalorder %s43, %s59
    %p61 = scmp.eq.s32.totalorder %s14, 0
    %p62 = por %p60, %p61
    %s63 = ssub.s32 %s8, %s15
    %p64 = scmp.eq.s32.totalorder %s63, 0
    %s66 = sadd.s32 %s65, 1
    %s67 = scalar_select %p64, %s65, %s66
    %p70 = pneg %p64
    %p71 = scmp.eq.s32.totalorder %s8, 1
    %p72 = por %p70, %p71
    %p73 = scmp.ne.s32.totalorder %s65, %s68
    %p74 = scmp.eq.s32.totalorder %s8, 0
    %p75 = por %p73, %p74
    %p76 = scmp.ne.s32.totalorder %s65, %s68
    %p77 = scmp.eq.s32.totalorder %s13, 1
    %p78 = por %p76, %p77
    %p79 = scmp.ne.s32.totalorder %s68, %s69
    %p80 = scmp.eq.s32.totalorder %s13, 0
    %p81 = por %p79, %p80
    %p82 = scmp.ne.s32.totalorder %s68, %s69
    %p83 = scmp.eq.s32.totalorder %s14, 1
    %p84 = por %p82, %p83
    %p86 = scmp.ne.s32.totalorder %s69, %s85
    %p87 = scmp.eq.s32.totalorder %s14, 0
    %p88 = por %p86, %p87
    %p89 = scmp.le.s32.totalorder 1, %s8
    %p90 = scmp.lt.s32.totalorder %s8, 3
    %p91 = pnand %p89, %p90
    %p92 = pneg %p91
    // Predicated region
    $region9: #{tpu_custom_call.1} parent=5 // pred_check
      _
    $region10: #{tpu_custom_call.1} parent=5 // pred_check_branch
      %94 = sbr.rel (%p91) target = $region12
    $region11: #{tpu_custom_call.1} parent=5 // pred_region
      %s95 = ssub.s32 %s8, 1
      // Predicated region
      $region13: #{tpu_custom_call.1} parent=11 // pred_check
        %p96 = pneg %p29
      $region14: #{tpu_custom_call.1} parent=11 // pred_check_branch
        %98 = sbr.rel (%p96) target = $region16
      $region15: #{tpu_custom_call.1} parent=11 // pred_region
        _
      $region16: #{tpu_custom_call.1} parent=11 // pred_fallthru
        _
    $region12: #{tpu_custom_call.1} parent=5 // pred_fallthru
      _
    %p99 = scmp.lt.s32.totalorder %s8, 2
    // Predicated region
    $region17: #{tpu_custom_call.1} parent=5 // pred_check
      %p100 = pneg %p99
    $region18: #{tpu_custom_call.1} parent=5 // pred_check_branch
      %102 = sbr.rel (%p100) target = $region20
    $region19: #{tpu_custom_call.1} parent=5 // pred_region
      // Predicated region
      $region21: #{tpu_custom_call.1} parent=19 // pred_check
        %p103 = pneg %p49
      $region22: #{tpu_custom_call.1} parent=19 // pred_check_branch
        %105 = sbr.rel (%p103) target = $region24
      $region23: #{tpu_custom_call.1} parent=19 // pred_region
        %s106 = smul.u32 8, %s8
        %p107 = scmp.lt.s32.totalorder %s106, 15
        %s108 = scalar_select %p107, %s106, 15
        %s109 = smul.addr %s108, 8
        %s110 = scalar_lea.vmem %s1, %s109
        %s111 = smul.u32 8, %s8
      $region24: #{tpu_custom_call.1} parent=19 // pred_fallthru
        _
    $region20: #{tpu_custom_call.1} parent=5 // pred_fallthru
      _
    %p112 = scmp.le.s32.totalorder 1, %s8
    %p113 = scmp.lt.s32.totalorder %s8, 3
    %p114 = pnand %p112, %p113
    %p115 = pneg %p114
    // Predicated region
    $region25: #{tpu_custom_call.1} parent=5 // pred_check
      _
    $region26: #{tpu_custom_call.1} parent=5 // pred_check_branch
      %117 = sbr.rel (%p114) target = $region28
    $region27: #{tpu_custom_call.1} parent=5 // pred_region
      %s118 = ssub.s32 %s8, 1
      %p119 = pneg %p29
      %p120 = pneg %p26
      %s121 = smul.u32 8, %s13
      %p122 = scmp.lt.s32.totalorder %s121, 15
      %s123 = scalar_select %p122, %s121, 15
      %s124 = smul.addr %s123, 8
      %s125 = scalar_lea.vmem %s1, %s124
      %p126 = pneg %p55
      %p127 = pneg %p52
      %p128 = pneg %p81
      %p129 = pneg %p78
      %s130 = smul.u32 8, %s13
      %p131 = scmp.lt.s32.totalorder %s130, 15
      %s132 = scalar_select %p131, %s130, 15
      %s133 = smul.addr %s132, 2
      %s134 = smul.addr %s133, 8
      %s135 = scalar_lea.vmem %s2, %s134
      %s136 = smul.u32 8, %s13
      %p137 = scmp.lt.s32.totalorder %s136, 15
      %s138 = scalar_select %p137, %s136, 15
      %s139 = smul.addr %s138, 8
      %s140 = scalar_lea.vmem %s1, %s139
      %s141 = smul.u32 8, %s13
      %s142 = smul.u32 8, %s13
      %p143 = scmp.lt.s32.totalorder %s142, 15
      %s144 = scalar_select %p143, %s142, 15
      %s145 = smul.addr %s144, 2
      %s146 = smul.addr %s145, 8
      %s147 = scalar_lea.vmem %s2, %s146
      %s148 = smul.u32 8, %s13
      %v149 = vld [vmem:[%s140] sm:$0xff]
      %v150 = vld [vmem:[%s140 + $0x8] sm:$0xff]
      %v151 = vld [vmem:[%s140 + $0x10] sm:$0xff]
      %v152 = vld [vmem:[%s140 + $0x18] sm:$0xff]
      %v153 = vld [vmem:[%s140 + $0x20] sm:$0xff]
      %v154 = vld [vmem:[%s140 + $0x28] sm:$0xff]
      %v155 = vld [vmem:[%s140 + $0x30] sm:$0xff]
      %v156 = vld [vmem:[%s140 + $0x38] sm:$0xff]
      %v157 = vld [vmem:[%s0] sm:$0xff]
      %v158 = vld [vmem:[%s0 + $0x8] sm:$0xff]
      %vm159 = vcmask 64512
      %v161 = vsel %vm159, %v149, 0
      %v164 = vsel %vm159, %v150, 0
      %v167 = vsel %vm159, %v151, 0
      %v170 = vsel %vm159, %v152, 0
      %v173 = vsel %vm159, %v153, 0
      %v176 = vsel %vm159, %v154, 0
      %v179 = vsel %vm159, %v155, 0
      %v182 = vsel %vm159, %v156, 0
      %v184 = vand.u32 %v158, 4294901760
      %185 = vmatprep.subr.mxu0 %v184
      %v186 = vand.u32 %v157, 4294901760
      %187 = vmatpush1.msra.mxu0 %v186
      %188 = vmatprep.subr.mxu0 0.0
      %189 = vmatpush1.msra.mxu0 0.0
      %190 = vmatprep.subr.mxu0 0.0
      %191 = vmatpush1.msra.mxu0 0.0
      %192 = vmatprep.subr.mxu0 0.0
      %193 = vmatpush1.msra.mxu0 0.0
      %194 = vmatprep.subr.mxu0 0.0
      %195 = vmatpush1.msra.mxu0 0.0
      %196 = vmatprep.subr.mxu0 0.0
      %197 = vmatpush1.msra.mxu0 0.0
      %198 = vmatprep.subr.mxu0 0.0
      %199 = vmatpush1.msra.mxu0 0.0
      %200 = vmatprep.subr.mxu0 0.0
      %201 = vmatpush1.msra.mxu0 0.0
      %202 = vmatprep.subr.mxu0 0.0
      %203 = vmatpush1.msra.mxu0 0.0
      %204 = vmatprep.subr.mxu0 0.0
      %205 = vmatpush1.msra.mxu0 0.0
      %206 = vmatprep.subr.mxu0 0.0
      %207 = vmatpush1.msra.mxu0 0.0
      %208 = vmatprep.subr.mxu0 0.0
      %209 = vmatpush1.msra.mxu0 0.0
      %210 = vmatprep.subr.mxu0 0.0
      %211 = vmatpush1.msra.mxu0 0.0
      %212 = vmatprep.subr.mxu0 0.0
      %213 = vmatpush1.msra.mxu0 0.0
      %214 = vmatprep.subr.mxu0 0.0
      %215 = vmatpush1.msra.mxu0 0.0
      %216 = vmatprep.subr.mxu0 0.0
      %217 = vmatpush1.msra.mxu0 0.0
      %218 = vmatprep.subr.mxu0 0.0
      %219 = vmatpush1.msra.mxu0 0.0
      %220 = vmatprep.subr.mxu0 0.0
      %221 = vmatpush1.msra.mxu0 0.0
      %222 = vmatprep.subr.mxu0 0.0
      %223 = vmatpush1.msra.mxu0 0.0
      %224 = vmatprep.subr.mxu0 0.0
      %225 = vmatpush1.msra.mxu0 0.0
      %226 = vmatprep.subr.mxu0 0.0
      %227 = vmatpush1.msra.mxu0 0.0
      %228 = vmatprep.subr.mxu0 0.0
      %229 = vmatpush1.msra.mxu0 0.0
      %230 = vmatprep.subr.mxu0 0.0
      %231 = vmatpush1.msra.mxu0 0.0
      %232 = vmatprep.subr.mxu0 0.0
      %233 = vmatpush1.msra.mxu0 0.0
      %234 = vmatprep.subr.mxu0 0.0
      %235 = vmatpush1.msra.mxu0 0.0
      %236 = vmatprep.subr.mxu0 0.0
      %237 = vmatpush1.msra.mxu0 0.0
      %238 = vmatprep.subr.mxu0 0.0
      %239 = vmatpush1.msra.mxu0 0.0
      %240 = vmatprep.subr.mxu0 0.0
      %241 = vmatpush1.msra.mxu0 0.0
      %242 = vmatprep.subr.mxu0 0.0
      %243 = vmatpush1.msra.mxu0 0.0
      %244 = vmatprep.subr.mxu0 0.0
      %245 = vmatpush1.msra.mxu0 0.0
      %246 = vmatprep.subr.mxu0 0.0
      %247 = vmatpush1.msra.mxu0 0.0
      %248 = vmatprep.subr.mxu0 0.0
      %249 = vmatpush1.msra.mxu0 0.0
      %250 = vmatprep.mubr.f32.mxu0 0.0
      %v251 = vand.u32 %v161, 4294901760
      %v252 = vsub.f32 %v161, %v251
      %v253 = vand.u32 %v252, 4294901760
      %v254 = vsub.f32 %v252, %v253
      %v255 = vand.u32 %v254, 4294901760
      %256 = vmatmul.mubr.f32.gmra.mrb[0].mxu0 %v255
      %v257 = vpop.f32.mrb[0].mxu0
      %v258 = vadd.f32 0.0, %v257
      %v259 = vpop.f32.mrb[0].mxu0
      %v260 = vadd.f32 0.0, %v259
      %261 = vmatprep.mubr.f32.mxu0 0.0
      %v262 = vand.u32 %v164, 4294901760
      %v263 = vsub.f32 %v164, %v262
      %v264 = vand.u32 %v263, 4294901760
      %v265 = vsub.f32 %v263, %v264
      %v266 = vand.u32 %v265, 4294901760
      %267 = vmatmul.mubr.f32.gmra.mrb[0].mxu0 %v266
      %v268 = vpop.f32.mrb[0].mxu0
      %v269 = vadd.f32 0.0, %v268
      %v270 = vpop.f32.mrb[0].mxu0
      %v271 = vadd.f32 0.0, %v270
      %272 = vmatprep.mubr.f32.mxu0 0.0
      %v273 = vand.u32 %v167, 4294901760
      %v274 = vsub.f32 %v167, %v273
      %v275 = vand.u32 %v274, 4294901760
      %v276 = vsub.f32 %v274, %v275
      %v277 = vand.u32 %v276, 4294901760
      %278 = vmatmul.mubr.f32.gmra.mrb[0].mxu0 %v277
      %v279 = vpop.f32.mrb[0].mxu0
      %v280 = vadd.f32 0.0, %v279
      %v281 = vpop.f32.mrb[0].mxu0
      %v282 = vadd.f32 0.0, %v281
      %283 = vmatprep.mubr.f32.mxu0 0.0
      %v284 = vand.u32 %v170, 4294901760
      %v285 = vsub.f32 %v170, %v284
      %v286 = vand.u32 %v285, 4294901760
      %v287 = vsub.f32 %v285, %v286
      %v288 = vand.u32 %v287, 4294901760
      %289 = vmatmul.mubr.f32.gmra.mrb[0].mxu0 %v288
      %v290 = vpop.f32.mrb[0].mxu0
      %v291 = vadd.f32 0.0, %v290
      %v292 = vpop.f32.mrb[0].mxu0
      %v293 = vadd.f32 0.0, %v292
      %294 = vmatprep.mubr.f32.mxu0 0.0
      %v295 = vand.u32 %v173, 4294901760
      %v296 = vsub.f32 %v173, %v295
      %v297 = vand.u32 %v296, 4294901760
      %v298 = vsub.f32 %v296, %v297
      %v299 = vand.u32 %v298, 4294901760
      %300 = vmatmul.mubr.f32.gmra.mrb[0].mxu0 %v299
      %v301 = vpop.f32.mrb[0].mxu0
      %v302 = vadd.f32 0.0, %v301
      %v303 = vpop.f32.mrb[0].mxu0
      %v304 = vadd.f32 0.0, %v303
      %305 = vmatprep.mubr.f32.mxu0 0.0
      %v306 = vand.u32 %v176, 4294901760
      %v307 = vsub.f32 %v176, %v306
      %v308 = vand.u32 %v307, 4294901760
      %v309 = vsub.f32 %v307, %v308
      %v310 = vand.u32 %v309, 4294901760
      %311 = vmatmul.mubr.f32.gmra.mrb[0].mxu0 %v310
      %v312 = vpop.f32.mrb[0].mxu0
      %v313 = vadd.f32 0.0, %v312
      %v314 = vpop.f32.mrb[0].mxu0
      %v315 = vadd.f32 0.0, %v314
      %316 = vmatprep.mubr.f32.mxu0 0.0
      %v317 = vand.u32 %v179, 4294901760
      %v318 = vsub.f32 %v179, %v317
      %v319 = vand.u32 %v318, 4294901760
      %v320 = vsub.f32 %v318, %v319
      %v321 = vand.u32 %v320, 4294901760
      %322 = vmatmul.mubr.f32.gmra.mrb[0].mxu0 %v321
      %v323 = vpop.f32.mrb[0].mxu0
      %v324 = vadd.f32 0.0, %v323
      %v325 = vpop.f32.mrb[0].mxu0
      %v326 = vadd.f32 0.0, %v325
      %327 = vmatprep.mubr.f32.mxu0 0.0
      %v328 = vand.u32 %v182, 4294901760
      %v329 = vsub.f32 %v182, %v328
      %v330 = vand.u32 %v329, 4294901760
      %v331 = vsub.f32 %v329, %v330
      %v332 = vand.u32 %v331, 4294901760
      %333 = vmatmul.mubr.f32.gmra.mrb[0].mxu0 %v332
      %v334 = vpop.f32.mrb[0].mxu0
      %v335 = vadd.f32 0.0, %v334
      %v336 = vpop.f32.mrb[0].mxu0
      %v337 = vadd.f32 0.0, %v336
      %338 = vdwg.mxu0
      %v339 = vand.u32 %v158, 4294901760
      %v340 = vsub.f32 %v158, %v339
      %v341 = vand.u32 %v340, 4294901760
      %v342 = vsub.f32 %v340, %v341
      %v343 = vand.u32 %v342, 4294901760
      %344 = vmatprep.subr.mxu0 %v343
      %v345 = vand.u32 %v157, 4294901760
      %v346 = vsub.f32 %v157, %v345
      %v347 = vand.u32 %v346, 4294901760
      %v348 = vsub.f32 %v346, %v347
      %v349 = vand.u32 %v348, 4294901760
      %350 = vmatpush1.msra.mxu0 %v349
      %351 = vmatprep.subr.mxu0 0.0
      %352 = vmatpush1.msra.mxu0 0.0
      %353 = vmatprep.subr.mxu0 0.0
      %354 = vmatpush1.msra.mxu0 0.0
      %355 = vmatprep.subr.mxu0 0.0
      %356 = vmatpush1.msra.mxu0 0.0
      %357 = vmatprep.subr.mxu0 0.0
      %358 = vmatpush1.msra.mxu0 0.0
      %359 = vmatprep.subr.mxu0 0.0
      %360 = vmatpush1.msra.mxu0 0.0
      %361 = vmatprep.subr.mxu0 0.0
      %362 = vmatpush1.msra.mxu0 0.0
      %363 = vmatprep.subr.mxu0 0.0
      %364 = vmatpush1.msra.mxu0 0.0
      %365 = vmatprep.subr.mxu0 0.0
      %366 = vmatpush1.msra.mxu0 0.0
      %367 = vmatprep.subr.mxu0 0.0
      %368 = vmatpush1.msra.mxu0 0.0
      %369 = vmatprep.subr.mxu0 0.0
      %370 = vmatpush1.msra.mxu0 0.0
      %371 = vmatprep.subr.mxu0 0.0
      %372 = vmatpush1.msra.mxu0 0.0
      %373 = vmatprep.subr.mxu0 0.0
      %374 = vmatpush1.msra.mxu0 0.0
      %375 = vmatprep.subr.mxu0 0.0
      %376 = vmatpush1.msra.mxu0 0.0
      %377 = vmatprep.subr.mxu0 0.0
      %378 = vmatpush1.msra.mxu0 0.0
      %379 = vmatprep.subr.mxu0 0.0
      %380 = vmatpush1.msra.mxu0 0.0
      %381 = vmatprep.subr.mxu0 0.0
      %382 = vmatpush1.msra.mxu0 0.0
      %383 = vmatprep.subr.mxu0 0.0
      %384 = vmatpush1.msra.mxu0 0.0
      %385 = vmatprep.subr.mxu0 0.0
      %386 = vmatpush1.msra.mxu0 0.0
      %387 = vmatprep.subr.mxu0 0.0
      %388 = vmatpush1.msra.mxu0 0.0
      %389 = vmatprep.subr.mxu0 0.0
      %390 = vmatpush1.msra.mxu0 0.0
      %391 = vmatprep.subr.mxu0 0.0
      %392 = vmatpush1.msra.mxu0 0.0
      %393 = vmatprep.subr.mxu0 0.0
      %394 = vmatpush1.msra.mxu0 0.0
      %395 = vmatprep.subr.mxu0 0.0
      %396 = vmatpush1.msra.mxu0 0.0
      %397 = vmatprep.subr.mxu0 0.0
      %398 = vmatpush1.msra.mxu0 0.0
      %399 = vmatprep.subr.mxu0 0.0
      %400 = vmatpush1.msra.mxu0 0.0
      %401 = vmatprep.subr.mxu0 0.0
      %402 = vmatpush1.msra.mxu0 0.0
      %403 = vmatprep.subr.mxu0 0.0
      %404 = vmatpush1.msra.mxu0 0.0
      %405 = vmatprep.subr.mxu0 0.0
      %406 = vmatpush1.msra.mxu0 0.0
      %407 = vmatprep.subr.mxu0 0.0
      %408 = vmatpush1.msra.mxu0 0.0
      %409 = vmatprep.subr.mxu0 0.0
      %410 = vmatpush1.msra.mxu0 0.0
      %411 = vmatprep.subr.mxu0 0.0
      %412 = vmatpush1.msra.mxu0 0.0
      %413 = vmatprep.mubr.f32.mxu0 0.0
      %v414 = vand.u32 %v161, 4294901760
      %415 = vmatmul.mubr.f32.gmra.mrb[0].mxu0 %v414
      %v416 = vpop.f32.mrb[0].mxu0
      %v417 = vadd.f32 %v258, %v416
      %v418 = vpop.f32.mrb[0].mxu0
      %v419 = vadd.f32 %v260, %v418
      %420 = vmatprep.mubr.f32.mxu0 0.0
      %v421 = vand.u32 %v164, 4294901760
      %422 = vmatmul.mubr.f32.gmra.mrb[0].mxu0 %v421
      %v423 = vpop.f32.mrb[0].mxu0
      %v424 = vadd.f32 %v269, %v423
      %v425 = vpop.f32.mrb[0].mxu0
      %v426 = vadd.f32 %v271, %v425
      %427 = vmatprep.mubr.f32.mxu0 0.0
      %v428 = vand.u32 %v167, 4294901760
      %429 = vmatmul.mubr.f32.gmra.mrb[0].mxu0 %v428
      %v430 = vpop.f32.mrb[0].mxu0
      %v431 = vadd.f32 %v280, %v430
      %v432 = vpop.f32.mrb[0].mxu0
      %v433 = vadd.f32 %v282, %v432
      %434 = vmatprep.mubr.f32.mxu0 0.0
      %v435 = vand.u32 %v170, 4294901760
      %436 = vmatmul.mubr.f32.gmra.mrb[0].mxu0 %v435
      %v437 = vpop.f32.mrb[0].mxu0
      %v438 = vadd.f32 %v291, %v437
      %v439 = vpop.f32.mrb[0].mxu0
      %v440 = vadd.f32 %v293, %v439
      %441 = vmatprep.mubr.f32.mxu0 0.0
      %v442 = vand.u32 %v173, 4294901760
      %443 = vmatmul.mubr.f32.gmra.mrb[0].mxu0 %v442
      %v444 = vpop.f32.mrb[0].mxu0
      %v445 = vadd.f32 %v302, %v444
      %v446 = vpop.f32.mrb[0].mxu0
      %v447 = vadd.f32 %v304, %v446
      %448 = vmatprep.mubr.f32.mxu0 0.0
      %v449 = vand.u32 %v176, 4294901760
      %450 = vmatmul.mubr.f32.gmra.mrb[0].mxu0 %v449
      %v451 = vpop.f32.mrb[0].mxu0
      %v452 = vadd.f32 %v313, %v451
      %v453 = vpop.f32.mrb[0].mxu0
      %v454 = vadd.f32 %v315, %v453
      %455 = vmatprep.mubr.f32.mxu0 0.0
      %v456 = vand.u32 %v179, 4294901760
      %457 = vmatmul.mubr.f32.gmra.mrb[0].mxu0 %v456
      %v458 = vpop.f32.mrb[0].mxu0
      %v459 = vadd.f32 %v324, %v458
      %v460 = vpop.f32.mrb[0].mxu0
      %v461 = vadd.f32 %v326, %v460
      %462 = vmatprep.mubr.f32.mxu0 0.0
      %v463 = vand.u32 %v182, 4294901760
      %464 = vmatmul.mubr.f32.gmra.mrb[0].mxu0 %v463
      %v465 = vpop.f32.mrb[0].mxu0
      %v466 = vadd.f32 %v335, %v465
      %v467 = vpop.f32.mrb[0].mxu0
      %v468 = vadd.f32 %v337, %v467
      %469 = vdwg.mxu0
      %v470 = vand.u32 %v158, 4294901760
      %v471 = vsub.f32 %v158, %v470
      %472 = vmatprep.subr.mxu0 %v471
      %v473 = vand.u32 %v157, 4294901760
      %v474 = vsub.f32 %v157, %v473
      %475 = vmatpush1.msra.mxu0 %v474
      %476 = vmatprep.subr.mxu0 0.0
      %477 = vmatpush1.msra.mxu0 0.0
      %478 = vmatprep.subr.mxu0 0.0
      %479 = vmatpush1.msra.mxu0 0.0
      %480 = vmatprep.subr.mxu0 0.0
      %481 = vmatpush1.msra.mxu0 0.0
      %482 = vmatprep.subr.mxu0 0.0
      %483 = vmatpush1.msra.mxu0 0.0
      %484 = vmatprep.subr.mxu0 0.0
      %485 = vmatpush1.msra.mxu0 0.0
      %486 = vmatprep.subr.mxu0 0.0
      %487 = vmatpush1.msra.mxu0 0.0
      %488 = vmatprep.subr.mxu0 0.0
      %489 = vmatpush1.msra.mxu0 0.0
      %490 = vmatprep.subr.mxu0 0.0
      %491 = vmatpush1.msra.mxu0 0.0
      %492 = vmatprep.subr.mxu0 0.0
      %493 = vmatpush1.msra.mxu0 0.0
      %494 = vmatprep.subr.mxu0 0.0
      %495 = vmatpush1.msra.mxu0 0.0
      %496 = vmatprep.subr.mxu0 0.0
      %497 = vmatpush1.msra.mxu0 0.0
      %498 = vmatprep.subr.mxu0 0.0
      %499 = vmatpush1.msra.mxu0 0.0
      %500 = vmatprep.subr.mxu0 0.0
      %501 = vmatpush1.msra.mxu0 0.0
      %502 = vmatprep.subr.mxu0 0.0
      %503 = vmatpush1.msra.mxu0 0.0
      %504 = vmatprep.subr.mxu0 0.0
      %505 = vmatpush1.msra.mxu0 0.0
      %506 = vmatprep.subr.mxu0 0.0
      %507 = vmatpush1.msra.mxu0 0.0
      %508 = vmatprep.subr.mxu0 0.0
      %509 = vmatpush1.msra.mxu0 0.0
      %510 = vmatprep.subr.mxu0 0.0
      %511 = vmatpush1.msra.mxu0 0.0
      %512 = vmatprep.subr.mxu0 0.0
      %513 = vmatpush1.msra.mxu0 0.0
      %514 = vmatprep.subr.mxu0 0.0
      %515 = vmatpush1.msra.mxu0 0.0
      %516 = vmatprep.subr.mxu0 0.0
      %517 = vmatpush1.msra.mxu0 0.0
      %518 = vmatprep.subr.mxu0 0.0
      %519 = vmatpush1.msra.mxu0 0.0
      %520 = vmatprep.subr.mxu0 0.0
      %521 = vmatpush1.msra.mxu0 0.0
      %522 = vmatprep.subr.mxu0 0.0
      %523 = vmatpush1.msra.mxu0 0.0
      %524 = vmatprep.subr.mxu0 0.0
      %525 = vmatpush1.msra.mxu0 0.0
      %526 = vmatprep.subr.mxu0 0.0
      %527 = vmatpush1.msra.mxu0 0.0
      %528 = vmatprep.subr.mxu0 0.0
      %529 = vmatpush1.msra.mxu0 0.0
      %530 = vmatprep.subr.mxu0 0.0
      %531 = vmatpush1.msra.mxu0 0.0
      %532 = vmatprep.subr.mxu0 0.0
      %533 = vmatpush1.msra.mxu0 0.0
      %534 = vmatprep.subr.mxu0 0.0
      %535 = vmatpush1.msra.mxu0 0.0
      %536 = vmatprep.subr.mxu0 0.0
      %537 = vmatpush1.msra.mxu0 0.0
      %538 = vmatprep.mubr.f32.mxu0 0.0
      %v539 = vand.u32 %v161, 4294901760
      %v540 = vsub.f32 %v161, %v539
      %541 = vmatmul.mubr.f32.gmra.mrb[0].mxu0 %v540
      %v542 = vpop.f32.mrb[0].mxu0
      %v543 = vadd.f32 %v417, %v542
      %v544 = vpop.f32.mrb[0].mxu0
      %v545 = vadd.f32 %v419, %v544
      %546 = vmatprep.mubr.f32.mxu0 0.0
      %v547 = vand.u32 %v164, 4294901760
      %v548 = vsub.f32 %v164, %v547
      %549 = vmatmul.mubr.f32.gmra.mrb[0].mxu0 %v548
      %v550 = vpop.f32.mrb[0].mxu0
      %v551 = vadd.f32 %v424, %v550
      %v552 = vpop.f32.mrb[0].mxu0
      %v553 = vadd.f32 %v426, %v552
      %554 = vmatprep.mubr.f32.mxu0 0.0
      %v555 = vand.u32 %v167, 4294901760
      %v556 = vsub.f32 %v167, %v555
      %557 = vmatmul.mubr.f32.gmra.mrb[0].mxu0 %v556
      %v558 = vpop.f32.mrb[0].mxu0
      %v559 = vadd.f32 %v431, %v558
      %v560 = vpop.f32.mrb[0].mxu0
      %v561 = vadd.f32 %v433, %v560
      %562 = vmatprep.mubr.f32.mxu0 0.0
      %v563 = vand.u32 %v170, 4294901760
      %v564 = vsub.f32 %v170, %v563
      %565 = vmatmul.mubr.f32.gmra.mrb[0].mxu0 %v564
      %v566 = vpop.f32.mrb[0].mxu0
      %v567 = vadd.f32 %v438, %v566
      %v568 = vpop.f32.mrb[0].mxu0
      %v569 = vadd.f32 %v440, %v568
      %570 = vmatprep.mubr.f32.mxu0 0.0
      %v571 = vand.u32 %v173, 4294901760
      %v572 = vsub.f32 %v173, %v571
      %573 = vmatmul.mubr.f32.gmra.mrb[0].mxu0 %v572
      %v574 = vpop.f32.mrb[0].mxu0
      %v575 = vadd.f32 %v445, %v574
      %v576 = vpop.f32.mrb[0].mxu0
      %v577 = vadd.f32 %v447, %v576
      %578 = vmatprep.mubr.f32.mxu0 0.0
      %v579 = vand.u32 %v176, 4294901760
      %v580 = vsub.f32 %v176, %v579
      %581 = vmatmul.mubr.f32.gmra.mrb[0].mxu0 %v580
      %v582 = vpop.f32.mrb[0].mxu0
      %v583 = vadd.f32 %v452, %v582
      %v584 = vpop.f32.mrb[0].mxu0
      %v585 = vadd.f32 %v454, %v584
      %586 = vmatprep.mubr.f32.mxu0 0.0
      %v587 = vand.u32 %v179, 4294901760
      %v588 = vsub.f32 %v179, %v587
      %589 = vmatmul.mubr.f32.gmra.mrb[0].mxu0 %v588
      %v590 = vpop.f32.mrb[0].mxu0
      %v591 = vadd.f32 %v459, %v590
      %v592 = vpop.f32.mrb[0].mxu0
      %v593 = vadd.f32 %v461, %v592
      %594 = vmatprep.mubr.f32.mxu0 0.0
      %v595 = vand.u32 %v182, 4294901760
      %v596 = vsub.f32 %v182, %v595
      %597 = vmatmul.mubr.f32.gmra.mrb[0].mxu0 %v596
      %v598 = vpop.f32.mrb[0].mxu0
      %v599 = vadd.f32 %v466, %v598
      %v600 = vpop.f32.mrb[0].mxu0
      %v601 = vadd.f32 %v468, %v600
      %602 = vdwg.mxu0
      %v603 = vand.u32 %v158, 4294901760
      %604 = vmatprep.subr.mxu0 %v603
      %v605 = vand.u32 %v157, 4294901760
      %606 = vmatpush1.msra.mxu0 %v605
      %607 = vmatprep.subr.mxu0 0.0
      %608 = vmatpush1.msra.mxu0 0.0
      %609 = vmatprep.subr.mxu0 0.0
      %610 = vmatpush1.msra.mxu0 0.0
      %611 = vmatprep.subr.mxu0 0.0
      %612 = vmatpush1.msra.mxu0 0.0
      %613 = vmatprep.subr.mxu0 0.0
      %614 = vmatpush1.msra.mxu0 0.0
      %615 = vmatprep.subr.mxu0 0.0
      %616 = vmatpush1.msra.mxu0 0.0
      %617 = vmatprep.subr.mxu0 0.0
      %618 = vmatpush1.msra.mxu0 0.0
      %619 = vmatprep.subr.mxu0 0.0
      %620 = vmatpush1.msra.mxu0 0.0
      %621 = vmatprep.subr.mxu0 0.0
      %622 = vmatpush1.msra.mxu0 0.0
      %623 = vmatprep.subr.mxu0 0.0
      %624 = vmatpush1.msra.mxu0 0.0
      %625 = vmatprep.subr.mxu0 0.0
      %626 = vmatpush1.msra.mxu0 0.0
      %627 = vmatprep.subr.mxu0 0.0
      %628 = vmatpush1.msra.mxu0 0.0
      %629 = vmatprep.subr.mxu0 0.0
      %630 = vmatpush1.msra.mxu0 0.0
      %631 = vmatprep.subr.mxu0 0.0
      %632 = vmatpush1.msra.mxu0 0.0
      %633 = vmatprep.subr.mxu0 0.0
      %634 = vmatpush1.msra.mxu0 0.0
      %635 = vmatprep.subr.mxu0 0.0
      %636 = vmatpush1.msra.mxu0 0.0
      %637 = vmatprep.subr.mxu0 0.0
      %638 = vmatpush1.msra.mxu0 0.0
      %639 = vmatprep.subr.mxu0 0.0
      %640 = vmatpush1.msra.mxu0 0.0
      %641 = vmatprep.subr.mxu0 0.0
      %642 = vmatpush1.msra.mxu0 0.0
      %643 = vmatprep.subr.mxu0 0.0
      %644 = vmatpush1.msra.mxu0 0.0
      %645 = vmatprep.subr.mxu0 0.0
      %646 = vmatpush1.msra.mxu0 0.0
      %647 = vmatprep.subr.mxu0 0.0
      %648 = vmatpush1.msra.mxu0 0.0
      %649 = vmatprep.subr.mxu0 0.0
      %650 = vmatpush1.msra.mxu0 0.0
      %651 = vmatprep.subr.mxu0 0.0
      %652 = vmatpush1.msra.mxu0 0.0
      %653 = vmatprep.subr.mxu0 0.0
      %654 = vmatpush1.msra.mxu0 0.0
      %655 = vmatprep.subr.mxu0 0.0
      %656 = vmatpush1.msra.mxu0 0.0
      %657 = vmatprep.subr.mxu0 0.0
      %658 = vmatpush1.msra.mxu0 0.0
      %659 = vmatprep.subr.mxu0 0.0
      %660 = vmatpush1.msra.mxu0 0.0
      %661 = vmatprep.subr.mxu0 0.0
      %662 = vmatpush1.msra.mxu0 0.0
      %663 = vmatprep.subr.mxu0 0.0
      %664 = vmatpush1.msra.mxu0 0.0
      %665 = vmatprep.subr.mxu0 0.0
      %666 = vmatpush1.msra.mxu0 0.0
      %667 = vmatprep.subr.mxu0 0.0
      %668 = vmatpush1.msra.mxu0 0.0
      %669 = vmatprep.mubr.f32.mxu0 0.0
      %v670 = vand.u32 %v161, 4294901760
      %v671 = vsub.f32 %v161, %v670
      %v672 = vand.u32 %v671, 4294901760
      %673 = vmatmul.mubr.f32.gmra.mrb[0].mxu0 %v672
      %v674 = vpop.f32.mrb[0].mxu0
      %v675 = vadd.f32 %v543, %v674
      %v676 = vpop.f32.mrb[0].mxu0
      %v677 = vadd.f32 %v545, %v676
      %678 = vmatprep.mubr.f32.mxu0 0.0
      %v679 = vand.u32 %v164, 4294901760
      %v680 = vsub.f32 %v164, %v679
      %v681 = vand.u32 %v680, 4294901760
      %682 = vmatmul.mubr.f32.gmra.mrb[0].mxu0 %v681
      %v683 = vpop.f32.mrb[0].mxu0
      %v684 = vadd.f32 %v551, %v683
      %v685 = vpop.f32.mrb[0].mxu0
      %v686 = vadd.f32 %v553, %v685
      %687 = vmatprep.mubr.f32.mxu0 0.0
      %v688 = vand.u32 %v167, 4294901760
      %v689 = vsub.f32 %v167, %v688
      %v690 = vand.u32 %v689, 4294901760
      %691 = vmatmul.mubr.f32.gmra.mrb[0].mxu0 %v690
      %v692 = vpop.f32.mrb[0].mxu0
      %v693 = vadd.f32 %v559, %v692
      %v694 = vpop.f32.mrb[0].mxu0
      %v695 = vadd.f32 %v561, %v694
      %696 = vmatprep.mubr.f32.mxu0 0.0
      %v697 = vand.u32 %v170, 4294901760
      %v698 = vsub.f32 %v170, %v697
      %v699 = vand.u32 %v698, 4294901760
      %700 = vmatmul.mubr.f32.gmra.mrb[0].mxu0 %v699
      %v701 = vpop.f32.mrb[0].mxu0
      %v702 = vadd.f32 %v567, %v701
      %v703 = vpop.f32.mrb[0].mxu0
      %v704 = vadd.f32 %v569, %v703
      %705 = vmatprep.mubr.f32.mxu0 0.0
      %v706 = vand.u32 %v173, 4294901760
      %v707 = vsub.f32 %v173, %v706
      %v708 = vand.u32 %v707, 4294901760
      %709 = vmatmul.mubr.f32.gmra.mrb[0].mxu0 %v708
      %v710 = vpop.f32.mrb[0].mxu0
      %v711 = vadd.f32 %v575, %v710
      %v712 = vpop.f32.mrb[0].mxu0
      %v713 = vadd.f32 %v577, %v712
      %714 = vmatprep.mubr.f32.mxu0 0.0
      %v715 = vand.u32 %v176, 4294901760
      %v716 = vsub.f32 %v176, %v715
      %v717 = vand.u32 %v716, 4294901760
      %718 = vmatmul.mubr.f32.gmra.mrb[0].mxu0 %v717
      %v719 = vpop.f32.mrb[0].mxu0
      %v720 = vadd.f32 %v583, %v719
      %v721 = vpop.f32.mrb[0].mxu0
      %v722 = vadd.f32 %v585, %v721
      %723 = vmatprep.mubr.f32.mxu0 0.0
      %v724 = vand.u32 %v179, 4294901760
      %v725 = vsub.f32 %v179, %v724
      %v726 = vand.u32 %v725, 4294901760
      %727 = vmatmul.mubr.f32.gmra.mrb[0].mxu0 %v726
      %v728 = vpop.f32.mrb[0].mxu0
      %v729 = vadd.f32 %v591, %v728
      %v730 = vpop.f32.mrb[0].mxu0
      %v731 = vadd.f32 %v593, %v730
      %732 = vmatprep.mubr.f32.mxu0 0.0
      %v733 = vand.u32 %v182, 4294901760
      %v734 = vsub.f32 %v182, %v733
      %v735 = vand.u32 %v734, 4294901760
      %736 = vmatmul.mubr.f32.gmra.mrb[0].mxu0 %v735
      %v737 = vpop.f32.mrb[0].mxu0
      %v738 = vadd.f32 %v599, %v737
      %v739 = vpop.f32.mrb[0].mxu0
      %v740 = vadd.f32 %v601, %v739
      %741 = vdwg.mxu0
      %v742 = vand.u32 %v158, 4294901760
      %v743 = vsub.f32 %v158, %v742
      %v744 = vand.u32 %v743, 4294901760
      %745 = vmatprep.subr.mxu0 %v744
      %v746 = vand.u32 %v157, 4294901760
      %v747 = vsub.f32 %v157, %v746
      %v748 = vand.u32 %v747, 4294901760
      %749 = vmatpush1.msra.mxu0 %v748
      %750 = vmatprep.subr.mxu0 0.0
      %751 = vmatpush1.msra.mxu0 0.0
      %752 = vmatprep.subr.mxu0 0.0
      %753 = vmatpush1.msra.mxu0 0.0
      %754 = vmatprep.subr.mxu0 0.0
      %755 = vmatpush1.msra.mxu0 0.0
      %756 = vmatprep.subr.mxu0 0.0
      %757 = vmatpush1.msra.mxu0 0.0
      %758 = vmatprep.subr.mxu0 0.0
      %759 = vmatpush1.msra.mxu0 0.0
      %760 = vmatprep.subr.mxu0 0.0
      %761 = vmatpush1.msra.mxu0 0.0
      %762 = vmatprep.subr.mxu0 0.0
      %763 = vmatpush1.msra.mxu0 0.0
      %764 = vmatprep.subr.mxu0 0.0
      %765 = vmatpush1.msra.mxu0 0.0
      %766 = vmatprep.subr.mxu0 0.0
      %767 = vmatpush1.msra.mxu0 0.0
      %768 = vmatprep.subr.mxu0 0.0
      %769 = vmatpush1.msra.mxu0 0.0
      %770 = vmatprep.subr.mxu0 0.0
      %771 = vmatpush1.msra.mxu0 0.0
      %772 = vmatprep.subr.mxu0 0.0
      %773 = vmatpush1.msra.mxu0 0.0
      %774 = vmatprep.subr.mxu0 0.0
      %775 = vmatpush1.msra.mxu0 0.0
      %776 = vmatprep.subr.mxu0 0.0
      %777 = vmatpush1.msra.mxu0 0.0
      %778 = vmatprep.subr.mxu0 0.0
      %779 = vmatpush1.msra.mxu0 0.0
      %780 = vmatprep.subr.mxu0 0.0
      %781 = vmatpush1.msra.mxu0 0.0
      %782 = vmatprep.subr.mxu0 0.0
      %783 = vmatpush1.msra.mxu0 0.0
      %784 = vmatprep.subr.mxu0 0.0
      %785 = vmatpush1.msra.mxu0 0.0
      %786 = vmatprep.subr.mxu0 0.0
      %787 = vmatpush1.msra.mxu0 0.0
      %788 = vmatprep.subr.mxu0 0.0
      %789 = vmatpush1.msra.mxu0 0.0
      %790 = vmatprep.subr.mxu0 0.0
      %791 = vmatpush1.msra.mxu0 0.0
      %792 = vmatprep.subr.mxu0 0.0
      %793 = vmatpush1.msra.mxu0 0.0
      %794 = vmatprep.subr.mxu0 0.0
      %795 = vmatpush1.msra.mxu0 0.0
      %796 = vmatprep.subr.mxu0 0.0
      %797 = vmatpush1.msra.mxu0 0.0
      %798 = vmatprep.subr.mxu0 0.0
      %799 = vmatpush1.msra.mxu0 0.0
      %800 = vmatprep.subr.mxu0 0.0
      %801 = vmatpush1.msra.mxu0 0.0
      %802 = vmatprep.subr.mxu0 0.0
      %803 = vmatpush1.msra.mxu0 0.0
      %804 = vmatprep.subr.mxu0 0.0
      %805 = vmatpush1.msra.mxu0 0.0
      %806 = vmatprep.subr.mxu0 0.0
      %807 = vmatpush1.msra.mxu0 0.0
      %808 = vmatprep.subr.mxu0 0.0
      %809 = vmatpush1.msra.mxu0 0.0
      %810 = vmatprep.subr.mxu0 0.0
      %811 = vmatpush1.msra.mxu0 0.0
      %812 = vmatprep.mubr.f32.mxu0 0.0
      %v813 = vand.u32 %v161, 4294901760
      %814 = vmatmul.mubr.f32.gmra.mrb[0].mxu0 %v813
      %v815 = vpop.f32.mrb[0].mxu0
      %v816 = vadd.f32 %v675, %v815
      %v817 = vpop.f32.mrb[0].mxu0
      %v818 = vadd.f32 %v677, %v817
      %819 = vmatprep.mubr.f32.mxu0 0.0
      %v820 = vand.u32 %v164, 4294901760
      %821 = vmatmul.mubr.f32.gmra.mrb[0].mxu0 %v820
      %v822 = vpop.f32.mrb[0].mxu0
      %v823 = vadd.f32 %v684, %v822
      %v824 = vpop.f32.mrb[0].mxu0
      %v825 = vadd.f32 %v686, %v824
      %826 = vmatprep.mubr.f32.mxu0 0.0
      %v827 = vand.u32 %v167, 4294901760
      %828 = vmatmul.mubr.f32.gmra.mrb[0].mxu0 %v827
      %v829 = vpop.f32.mrb[0].mxu0
      %v830 = vadd.f32 %v693, %v829
      %v831 = vpop.f32.mrb[0].mxu0
      %v832 = vadd.f32 %v695, %v831
      %833 = vmatprep.mubr.f32.mxu0 0.0
      %v834 = vand.u32 %v170, 4294901760
      %835 = vmatmul.mubr.f32.gmra.mrb[0].mxu0 %v834
      %v836 = vpop.f32.mrb[0].mxu0
      %v837 = vadd.f32 %v702, %v836
      %v838 = vpop.f32.mrb[0].mxu0
      %v839 = vadd.f32 %v704, %v838
      %840 = vmatprep.mubr.f32.mxu0 0.0
      %v841 = vand.u32 %v173, 4294901760
      %842 = vmatmul.mubr.f32.gmra.mrb[0].mxu0 %v841
      %v843 = vpop.f32.mrb[0].mxu0
      %v844 = vadd.f32 %v711, %v843
      %v845 = vpop.f32.mrb[0].mxu0
      %v846 = vadd.f32 %v713, %v845
      %847 = vmatprep.mubr.f32.mxu0 0.0
      %v848 = vand.u32 %v176, 4294901760
      %849 = vmatmul.mubr.f32.gmra.mrb[0].mxu0 %v848
      %v850 = vpop.f32.mrb[0].mxu0
      %v851 = vadd.f32 %v720, %v850
      %v852 = vpop.f32.mrb[0].mxu0
      %v853 = vadd.f32 %v722, %v852
      %854 = vmatprep.mubr.f32.mxu0 0.0
      %v855 = vand.u32 %v179, 4294901760
      %856 = vmatmul.mubr.f32.gmra.mrb[0].mxu0 %v855
      %v857 = vpop.f32.mrb[0].mxu0
      %v858 = vadd.f32 %v729, %v857
      %v859 = vpop.f32.mrb[0].mxu0
      %v860 = vadd.f32 %v731, %v859
      %861 = vmatprep.mubr.f32.mxu0 0.0
      %v862 = vand.u32 %v182, 4294901760
      %863 = vmatmul.mubr.f32.gmra.mrb[0].mxu0 %v862
      %v864 = vpop.f32.mrb[0].mxu0
      %v865 = vadd.f32 %v738, %v864
      %v866 = vpop.f32.mrb[0].mxu0
      %v867 = vadd.f32 %v740, %v866
      %868 = vdwg.mxu0
      %v869 = vand.u32 %v158, 4294901760
      %870 = vmatprep.subr.mxu0 %v869
      %v871 = vand.u32 %v157, 4294901760
      %872 = vmatpush1.msra.mxu0 %v871
      %873 = vmatprep.subr.mxu0 0.0
      %874 = vmatpush1.msra.mxu0 0.0
      %875 = vmatprep.subr.mxu0 0.0
      %876 = vmatpush1.msra.mxu0 0.0
      %877 = vmatprep.subr.mxu0 0.0
      %878 = vmatpush1.msra.mxu0 0.0
      %879 = vmatprep.subr.mxu0 0.0
      %880 = vmatpush1.msra.mxu0 0.0
      %881 = vmatprep.subr.mxu0 0.0
      %882 = vmatpush1.msra.mxu0 0.0
      %883 = vmatprep.subr.mxu0 0.0
      %884 = vmatpush1.msra.mxu0 0.0
      %885 = vmatprep.subr.mxu0 0.0
      %886 = vmatpush1.msra.mxu0 0.0
      %887 = vmatprep.subr.mxu0 0.0
      %888 = vmatpush1.msra.mxu0 0.0
      %889 = vmatprep.subr.mxu0 0.0
      %890 = vmatpush1.msra.mxu0 0.0
      %891 = vmatprep.subr.mxu0 0.0
      %892 = vmatpush1.msra.mxu0 0.0
      %893 = vmatprep.subr.mxu0 0.0
      %894 = vmatpush1.msra.mxu0 0.0
      %895 = vmatprep.subr.mxu0 0.0
      %896 = vmatpush1.msra.mxu0 0.0
      %897 = vmatprep.subr.mxu0 0.0
      %898 = vmatpush1.msra.mxu0 0.0
      %899 = vmatprep.subr.mxu0 0.0
      %900 = vmatpush1.msra.mxu0 0.0
      %901 = vmatprep.subr.mxu0 0.0
      %902 = vmatpush1.msra.mxu0 0.0
      %903 = vmatprep.subr.mxu0 0.0
      %904 = vmatpush1.msra.mxu0 0.0
      %905 = vmatprep.subr.mxu0 0.0
      %906 = vmatpush1.msra.mxu0 0.0
      %907 = vmatprep.subr.mxu0 0.0
      %908 = vmatpush1.msra.mxu0 0.0
      %909 = vmatprep.subr.mxu0 0.0
      %910 = vmatpush1.msra.mxu0 0.0
      %911 = vmatprep.subr.mxu0 0.0
      %912 = vmatpush1.msra.mxu0 0.0
      %913 = vmatprep.subr.mxu0 0.0
      %914 = vmatpush1.msra.mxu0 0.0
      %915 = vmatprep.subr.mxu0 0.0
      %916 = vmatpush1.msra.mxu0 0.0
      %917 = vmatprep.subr.mxu0 0.0
      %918 = vmatpush1.msra.mxu0 0.0
      %919 = vmatprep.subr.mxu0 0.0
      %920 = vmatpush1.msra.mxu0 0.0
      %921 = vmatprep.subr.mxu0 0.0
      %922 = vmatpush1.msra.mxu0 0.0
      %923 = vmatprep.subr.mxu0 0.0
      %924 = vmatpush1.msra.mxu0 0.0
      %925 = vmatprep.subr.mxu0 0.0
      %926 = vmatpush1.msra.mxu0 0.0
      %927 = vmatprep.subr.mxu0 0.0
      %928 = vmatpush1.msra.mxu0 0.0
      %929 = vmatprep.subr.mxu0 0.0
      %930 = vmatpush1.msra.mxu0 0.0
      %931 = vmatprep.subr.mxu0 0.0
      %932 = vmatpush1.msra.mxu0 0.0
      %933 = vmatprep.subr.mxu0 0.0
      %934 = vmatpush1.msra.mxu0 0.0
      %935 = vmatprep.mubr.f32.mxu0 0.0
      %v936 = vand.u32 %v161, 4294901760
      %937 = vmatmul.mubr.f32.gmra.mrb[0].mxu0 %v936
      %v938 = vpop.f32.mrb[0].mxu0
      %v939 = vadd.f32 %v816, %v938
      %v940 = vpop.f32.mrb[0].mxu0
      %v941 = vadd.f32 %v818, %v940
      %942 = vmatprep.mubr.f32.mxu0 0.0
      %v943 = vand.u32 %v164, 4294901760
      %944 = vmatmul.mubr.f32.gmra.mrb[0].mxu0 %v943
      %v945 = vpop.f32.mrb[0].mxu0
      %v946 = vadd.f32 %v823, %v945
      %v947 = vpop.f32.mrb[0].mxu0
      %v948 = vadd.f32 %v825, %v947
      %949 = vmatprep.mubr.f32.mxu0 0.0
      %v950 = vand.u32 %v167, 4294901760
      %951 = vmatmul.mubr.f32.gmra.mrb[0].mxu0 %v950
      %v952 = vpop.f32.mrb[0].mxu0
      %v953 = vadd.f32 %v830, %v952
      %v954 = vpop.f32.mrb[0].mxu0
      %v955 = vadd.f32 %v832, %v954
      %956 = vmatprep.mubr.f32.mxu0 0.0
      %v957 = vand.u32 %v170, 4294901760
      %958 = vmatmul.mubr.f32.gmra.mrb[0].mxu0 %v957
      %v959 = vpop.f32.mrb[0].mxu0
      %v960 = vadd.f32 %v837, %v959
      %v961 = vpop.f32.mrb[0].mxu0
      %v962 = vadd.f32 %v839, %v961
      %963 = vmatprep.mubr.f32.mxu0 0.0
      %v964 = vand.u32 %v173, 4294901760
      %965 = vmatmul.mubr.f32.gmra.mrb[0].mxu0 %v964
      %v966 = vpop.f32.mrb[0].mxu0
      %v967 = vadd.f32 %v844, %v966
      %v968 = vpop.f32.mrb[0].mxu0
      %v969 = vadd.f32 %v846, %v968
      %970 = vmatprep.mubr.f32.mxu0 0.0
      %v971 = vand.u32 %v176, 4294901760
      %972 = vmatmul.mubr.f32.gmra.mrb[0].mxu0 %v971
      %v973 = vpop.f32.mrb[0].mxu0
      %v974 = vadd.f32 %v851, %v973
      %v975 = vpop.f32.mrb[0].mxu0
      %v976 = vadd.f32 %v853, %v975
      %977 = vmatprep.mubr.f32.mxu0 0.0
      %v978 = vand.u32 %v179, 4294901760
      %979 = vmatmul.mubr.f32.gmra.mrb[0].mxu0 %v978
      %v980 = vpop.f32.mrb[0].mxu0
      %v981 = vadd.f32 %v858, %v980
      %v982 = vpop.f32.mrb[0].mxu0
      %v983 = vadd.f32 %v860, %v982
      %984 = vmatprep.mubr.f32.mxu0 0.0
      %v985 = vand.u32 %v182, 4294901760
      %986 = vmatmul.mubr.f32.gmra.mrb[0].mxu0 %v985
      %v987 = vpop.f32.mrb[0].mxu0
      %v988 = vadd.f32 %v865, %v987
      %v989 = vpop.f32.mrb[0].mxu0
      %v990 = vadd.f32 %v867, %v989
      %991 = vdwg.mxu0
      %992 = vst [vmem:[%s147] sm:$0xff] %v939
      %vm993 = vcmask 523264
      %994 = vst.msk [vmem:[%s147 + $0x8] sm:$0xff] %vm993, %v941
      %995 = vst [vmem:[%s147 + $0x10] sm:$0xff] %v946
      %996 = vst.msk [vmem:[%s147 + $0x18] sm:$0xff] %vm993, %v948
      %997 = vst [vmem:[%s147 + $0x20] sm:$0xff] %v953
      %998 = vst.msk [vmem:[%s147 + $0x28] sm:$0xff] %vm993, %v955
      %999 = vst [vmem:[%s147 + $0x30] sm:$0xff] %v960
      %1000 = vst.msk [vmem:[%s147 + $0x38] sm:$0xff] %vm993, %v962
      %1001 = vst [vmem:[%s147 + $0x40] sm:$0xff] %v967
      %1002 = vst.msk [vmem:[%s147 + $0x48] sm:$0xff] %vm993, %v969
      %1003 = vst [vmem:[%s147 + $0x50] sm:$0xff] %v974
      %1004 = vst.msk [vmem:[%s147 + $0x58] sm:$0xff] %vm993, %v976
      %1005 = vst [vmem:[%s147 + $0x60] sm:$0xff] %v981
      %1006 = vst.msk [vmem:[%s147 + $0x68] sm:$0xff] %vm993, %v983
      %1007 = vst [vmem:[%s147 + $0x70] sm:$0xff] %v988
      %1008 = vst.msk [vmem:[%s147 + $0x78] sm:$0xff] %vm993, %v990
      %s1009 = smul.u32 8, %s13
      %p1010 = scmp.lt.s32.totalorder %s1009, 15
      %s1011 = scalar_select %p1010, %s1009, 15
      %s1012 = smul.addr %s1011, 2
      %s1013 = smul.addr %s1012, 8
      %s1014 = scalar_lea.vmem %s2, %s1013
      // Predicated region
      $region29: #{tpu_custom_call.1} parent=27 // pred_check
        %p1015 = pneg %p78
      $region30: #{tpu_custom_call.1} parent=27 // pred_check_branch
        %1017 = sbr.rel (%p1015) target = $region32
      $region31: #{tpu_custom_call.1} parent=27 // pred_region
        %s1018 = smul.u32 8, %s13
      $region32: #{tpu_custom_call.1} parent=27 // pred_fallthru
        _
    $region28: #{tpu_custom_call.1} parent=5 // pred_fallthru
      _
    %p1019 = scmp.le.s32.totalorder 2, %s8
    // Predicated region
    $region33: #{tpu_custom_call.1} parent=5 // pred_check
      %p1020 = pneg %p1019
    $region34: #{tpu_custom_call.1} parent=5 // pred_check_branch
      %1022 = sbr.rel (%p1020) target = $region36
    $region35: #{tpu_custom_call.1} parent=5 // pred_region
      %s1023 = ssub.s32 %s8, 2
      // Predicated region
      $region37: #{tpu_custom_call.1} parent=35 // pred_check
        %p1024 = pneg %p84
      $region38: #{tpu_custom_call.1} parent=35 // pred_check_branch
        %1026 = sbr.rel (%p1024) target = $region40
      $region39: #{tpu_custom_call.1} parent=35 // pred_region
        %s1027 = smul.u32 8, %s14
        %p1028 = scmp.lt.s32.totalorder %s1027, 15
        %s1029 = scalar_select %p1028, %s1027, 15
        %s1030 = smul.addr %s1029, 2
        %s1031 = smul.addr %s1030, 8
        %s1032 = scalar_lea.vmem %s2, %s1031
      $region40: #{tpu_custom_call.1} parent=35 // pred_fallthru
        _
    $region36: #{tpu_custom_call.1} parent=5 // pred_fallthru
      _
  $region6: #{tpu_custom_call.1} parent=0 // loop_footer
    %s12 = sadd.s32 1, %s8
  $region7: #{tpu_custom_call.1} parent=0 // loop_footer_branch
    %7 = sbr.rel target = $region3
  $region8: #{tpu_custom_call.1} parent=0 // loop_exit
    _

</llo_original>
